<compile_context>
chip_gen: v6e
topology: v6e:2x2x1
jax: 0.10.0
libtpu: 0.0.40
codegen_flags: <defaults>
</compile_context>

<pallas_src>
import functools
import math

import jax
import jax.numpy as jnp
from jax.experimental import pallas as pl
from jax.experimental.pallas import tpu as pltpu

NUM_LAYERS = 7        # 6 hidden (tanh) + 1 output linear
NUM_MODES = 3         # nn.Embedding(3, 5)
EMB_DIM = 5
HIDDEN_PAD = 128      # lane-dense padded width for hidden/output layers
TB_TARGET = 1024      # batch-tile target: amortizes ~0.35us/step, fills MXU M


def _round_up(n, m):
    return ((n + m - 1) // m) * m


# --------------------------------------------------------------------------
# Kernel: 7 back-to-back matmuls on one (TB, *) batch tile.
#   x_ref : (TB, F0P)   narrow input slab (features + one-hot mode columns)
#   w0_ref: (F0P, 128)  layer-0 weight with the embedding folded in
#   w_ref : (6, 128, 128) layers 1..6
#   b_ref : (7, 1, 128) all biases (f32)
# --------------------------------------------------------------------------
def mlp_kernel(x_ref, w0_ref, w_ref, b_ref, out_ref, *, act_dtype):
    wd = w0_ref.dtype                      # f32 or bf16 (f32 accumulation)
    n_rest = w_ref.shape[0]                # layers 1 .. NUM_LAYERS-1

    # Layer 0: embedding already folded into w0 (the one-hot columns of x
    # select the pre-multiplied E @ W0 rows).  Narrow K keeps input DMA small.
    h = jnp.dot(x_ref[...].astype(wd), w0_ref[...],
                preferred_element_type=jnp.float32)
    h = jnp.tanh((h + b_ref[0]).astype(act_dtype))

    for i in range(n_rest):                # static unroll: 6 matmuls
        h = jnp.dot(h.astype(wd), w_ref[i],
                    preferred_element_type=jnp.float32)
        h = h + b_ref[i + 1]
        if i < n_rest - 1:
            h = jnp.tanh(h.astype(act_dtype))
    out_ref[...] = h.astype(out_ref.dtype)


# --------------------------------------------------------------------------
# Wrapper
# --------------------------------------------------------------------------
def _batch_tiling(B):
    """Pick (b_pad, tb): one tile if small, else >=2 balanced tiles (v7x)."""
    b8 = _round_up(B, 8)
    if b8 <= TB_TARGET:
        return b8, b8
    n_tiles = -(-b8 // TB_TARGET)                 # ceil -> >= 2
    tb = _round_up(-(-b8 // n_tiles), 8)          # balanced, multiple of 8
    b_pad = _round_up(b8, tb)
    return b_pad, tb


@functools.partial(jax.jit, static_argnames=("out_dim", "act_dtype"))
def embedded_custom_network_forward(x, mode, w0, w_slab, b_slab, *,
                                    out_dim, act_dtype=jnp.float32):
    """x: (B, input_size + state_size) f32, mode: (B,) int32."""
    B, F = x.shape
    F0P = w0.shape[0]                     # padded layer-0 K (e.g. 32)
    H = w_slab.shape[-1]                  # 128

    b_pad, tb = _batch_tiling(B)
    grid = (b_pad // tb,)

    # Narrow input slab: features in cols [0:F], one_hot(mode) in
    # cols [F:F+3] (matching the folded E @ W0 rows of w0).  Padded batch
    # rows are all-zero -> no one-hot -> harmless (sliced off afterwards).
    one_hot = jax.nn.one_hot(mode, NUM_MODES, dtype=jnp.float32)      # (B, 3)
    x_aug = jnp.concatenate([x, one_hot], axis=-1)                    # (B, F+3)
    x_p = jnp.zeros((b_pad, F0P), jnp.float32).at[:B, :F + NUM_MODES].set(x_aug)

    out = pl.pallas_call(
        functools.partial(mlp_kernel, act_dtype=act_dtype),
        out_shape=jax.ShapeDtypeStruct((b_pad, H), jnp.float32),
        grid=grid,
        in_specs=[
            pl.BlockSpec((tb, F0P), lambda i: (i, 0)),        # x tile (narrow)
            # Constant block indices -> parameters stay VMEM-resident across
            # all grid iterations (no per-tile re-DMA).
            pl.BlockSpec(w0.shape, lambda i: (0, 0)),
            pl.BlockSpec(w_slab.shape, lambda i: (0, 0, 0)),
            pl.BlockSpec(b_slab.shape, lambda i: (0, 0, 0)),
        ],
        out_specs=pl.BlockSpec((tb, H), lambda i: (i, 0)),    # lane-dense out
        compiler_params=pltpu.CompilerParams(
            dimension_semantics=("parallel",)),               # megacore (v7x)
    )(x_p, w0, w_slab, b_slab)

    return out[:B, :out_dim]


# --------------------------------------------------------------------------
# Parameter init + one-time packing into lane-dense slabs
# --------------------------------------------------------------------------
def xavier_uniform(key, shape):
    fan_in, fan_out = shape
    a = math.sqrt(6.0 / (fan_in + fan_out))
    return jax.random.uniform(key, shape, jnp.float32, -a, a)


def init_params(key, input_size, state_size):
    embedded_input_size = input_size + EMB_DIM
    layer_sizes = [embedded_input_size + state_size] + [64] * 6 + [state_size]

    keys = jax.random.split(key, NUM_LAYERS + 1)
    embedding = jax.random.normal(keys[0], (NUM_MODES, EMB_DIM), jnp.float32)

    weights, biases = [], []
    for i in range(NUM_LAYERS):
        # Xavier bound is symmetric in fan_in/fan_out -> build (in, out).
        w = xavier_uniform(keys[i + 1], (layer_sizes[i], layer_sizes[i + 1]))
        b = jnp.zeros((1, layer_sizes[i + 1]), jnp.float32)
        weights.append(w)
        biases.append(b)
    return {"embedding": embedding, "weights": weights, "biases": biases}


def pack_params(params, weight_dtype=jnp.float32):
    """Pack parameters into 3 zero-padded, lane-dense slabs.

    Layer 0 gets the embedding folded in:
        [x, E[mode]] @ W0 == x @ W0[:feat_x] + one_hot(mode) @ (E @ W0[feat_x:])
    so the kernel sees a single narrow matmul.  Zero rows/columns are used
    consistently, so padded lanes stay exactly zero through every layer.
    """
    emb = params["embedding"]                 # (3, 5)
    ws, bs = params["weights"], params["biases"]
    n = len(ws)
    feat_x = ws[0].shape[0] - EMB_DIM         # input_size + state_size
    f0_pad = _round_up(feat_x + NUM_MODES, 8)  # narrow layer-0 K (e.g. 32)

    # Layer-0 weight with folded embedding.
    folded = jnp.dot(emb, ws[0][feat_x:],
                     precision=jax.lax.Precision.HIGHEST)           # (3, 64)
    w0 = jnp.zeros((f0_pad, HIDDEN_PAD), jnp.float32)
    w0 = w0.at[:feat_x, :ws[0].shape[1]].set(ws[0][:feat_x])
    w0 = w0.at[feat_x:feat_x + NUM_MODES, :ws[0].shape[1]].set(folded)

    # Layers 1..n-1 and all biases.
    w_slab = jnp.zeros((n - 1, HIDDEN_PAD, HIDDEN_PAD), jnp.float32)
    b_slab = jnp.zeros((n, 1, HIDDEN_PAD), jnp.float32)
    b_slab = b_slab.at[0, 0, :bs[0].shape[1]].set(bs[0].reshape(-1))
    for i in range(1, n):
        w_slab = w_slab.at[i - 1, :ws[i].shape[0], :ws[i].shape[1]].set(ws[i])
        b_slab = b_slab.at[i, 0, :bs[i].shape[1]].set(bs[i].reshape(-1))

    return w0.astype(weight_dtype), w_slab.astype(weight_dtype), b_slab


# --------------------------------------------------------------------------
# Pure-JAX reference (mirrors the PyTorch module)
# --------------------------------------------------------------------------
def reference_forward(x, mode, params):
    emb = params["embedding"]
    mode_embed = jnp.take(emb, mode, axis=0)
    h = jnp.concatenate([x, mode_embed], axis=-1)
    for i in range(NUM_LAYERS):
        h = jnp.dot(h, params["weights"][i],
                    precision=jax.lax.Precision.HIGHEST) + params["biases"][i]
        if i < NUM_LAYERS - 1:
            h = jnp.tanh(h)
    return h


if __name__ == "__main__":
    input_size = 16
    state_size = 8
    batch = 8

    key = jax.random.PRNGKey(0)
    k_params, k_x, k_mode = jax.random.split(key, 3)

    params = init_params(k_params, input_size, state_size)
    x = jax.random.normal(k_x, (batch, input_size + state_size), jnp.float32)
    mode = jax.random.randint(k_mode, (batch,), 0, NUM_MODES, jnp.int32)

    ref = reference_forward(x, mode, params)

    # --- f32 weights + f32 activations: near-exact check --------------------
    w0, w_slab, b_slab = pack_params(params, weight_dtype=jnp.float32)
    out = embedded_custom_network_forward(x, mode, w0, w_slab, b_slab,
                                          out_dim=state_size)
    out = jax.block_until_ready(out)
    assert out.shape == (batch, state_size)
    assert jnp.allclose(out, ref, atol=1e-3, rtol=1e-3), \
        float(jnp.max(jnp.abs(out - ref)))

    # --- bf16 weights + bf16 activations (v6e/v7x recommended path) ---------
    w0b, w_slabb, b_slabb = pack_params(params, weight_dtype=jnp.bfloat16)
    out16 = embedded_custom_network_forward(x, mode, w0b, w_slabb, b_slabb,
                                            out_dim=state_size,
                                            act_dtype=jnp.bfloat16)
    out16 = jax.block_until_ready(out16)
    assert jnp.allclose(out16, ref, atol=5e-2, rtol=5e-2)

    # --- multi-tile grid smoke test (exercises >=2 grid steps / megacore) ---
    big_b = 2500
    kx2, km2 = jax.random.split(jax.random.PRNGKey(1))
    x2 = jax.random.normal(kx2, (big_b, input_size + state_size), jnp.float32)
    mode2 = jax.random.randint(km2, (big_b,), 0, NUM_MODES, jnp.int32)
    out2 = embedded_custom_network_forward(x2, mode2, w0, w_slab, b_slab,
                                           out_dim=state_size)
    out2 = jax.block_until_ready(out2)
    ref2 = reference_forward(x2, mode2, params)
    assert out2.shape == (big_b, state_size)
    assert jnp.allclose(out2, ref2, atol=1e-3, rtol=1e-3)

    print("KERNEL_OK")
</pallas_src>

<mosaic_0001>
module attributes {stable_mosaic.version = 11 : i64} {
  func.func @mlp_kernel(%arg0: i32, %arg1: memref<8x32xf32, #tpu.memory_space<vmem>>, %arg2: memref<32x128xf32, #tpu.memory_space<vmem>>, %arg3: memref<6x128x128xf32, #tpu.memory_space<vmem>>, %arg4: memref<7x1x128xf32, #tpu.memory_space<vmem>>, %arg5: memref<8x128xf32, #tpu.memory_space<vmem>>) attributes {dimension_semantics = [#tpu.dimension_semantics<parallel>], iteration_bounds = array<i64: 1>, scalar_prefetch = 0 : i64, scratch_operands = 0 : i64, tpu.core_type = #tpu.core_type<tc>, window_params = [{transform_indices = @transform_0, window_bounds = array<i64: 8, 32>}, {pipeline_mode = #tpu.pipeline_mode<synchronous>, transform_indices = @transform_1, window_bounds = array<i64: 32, 128>}, {pipeline_mode = #tpu.pipeline_mode<synchronous>, transform_indices = @transform_2, window_bounds = array<i64: 6, 128, 128>}, {pipeline_mode = #tpu.pipeline_mode<synchronous>, transform_indices = @transform_3, window_bounds = array<i64: 7, 1, 128>}, {transform_indices = @transform_4, window_bounds = array<i64: 8, 128>}]} {
    %c0 = arith.constant 0 : index
    %c0_0 = arith.constant 0 : index
    %0 = vector.load %arg1[%c0, %c0_0] : memref<8x32xf32, #tpu.memory_space<vmem>>, vector<8x32xf32>
    %c0_1 = arith.constant 0 : index
    %c0_2 = arith.constant 0 : index
    %1 = vector.load %arg2[%c0_1, %c0_2] : memref<32x128xf32, #tpu.memory_space<vmem>>, vector<32x128xf32>
    %cst = arith.constant dense<0.000000e+00> : vector<8x128xf32>
    %2 = tpu.matmul %0, %1, %cst {dimension_numbers = #tpu.dot_dimension_numbers<[1], [0], [0], [1], [0, 0, 1, 1], [], []>} : vector<8x32xf32>, vector<32x128xf32>, vector<8x128xf32> -> vector<8x128xf32>
    %c0_3 = arith.constant 0 : index
    %c0_4 = arith.constant 0 : index
    %c0_5 = arith.constant 0 : index
    %3 = vector.load %arg4[%c0_3, %c0_4, %c0_5] : memref<7x1x128xf32, #tpu.memory_space<vmem>>, vector<1x1x128xf32>
    %4 = vector.shape_cast %3 : vector<1x1x128xf32> to vector<1x128xf32>
    %5 = vector.broadcast %4 : vector<1x128xf32> to vector<8x128xf32>
    %6 = arith.addf %2, %5 : vector<8x128xf32>
    %7 = math.tanh %6 : vector<8x128xf32>
    %c0_6 = arith.constant 0 : index
    %c0_7 = arith.constant 0 : index
    %c0_8 = arith.constant 0 : index
    %8 = vector.load %arg3[%c0_6, %c0_7, %c0_8] : memref<6x128x128xf32, #tpu.memory_space<vmem>>, vector<1x128x128xf32>
    %9 = vector.shape_cast %8 : vector<1x128x128xf32> to vector<128x128xf32>
    %cst_9 = arith.constant dense<0.000000e+00> : vector<8x128xf32>
    %10 = tpu.matmul %7, %9, %cst_9 {dimension_numbers = #tpu.dot_dimension_numbers<[1], [0], [0], [1], [0, 0, 1, 1], [], []>} : vector<8x128xf32>, vector<128x128xf32>, vector<8x128xf32> -> vector<8x128xf32>
    %c1 = arith.constant 1 : index
    %c0_10 = arith.constant 0 : index
    %c0_11 = arith.constant 0 : index
    %11 = vector.load %arg4[%c1, %c0_10, %c0_11] : memref<7x1x128xf32, #tpu.memory_space<vmem>>, vector<1x1x128xf32>
    %12 = vector.shape_cast %11 : vector<1x1x128xf32> to vector<1x128xf32>
    %13 = vector.broadcast %12 : vector<1x128xf32> to vector<8x128xf32>
    %14 = arith.addf %10, %13 : vector<8x128xf32>
    %15 = math.tanh %14 : vector<8x128xf32>
    %c1_12 = arith.constant 1 : index
    %c0_13 = arith.constant 0 : index
    %c0_14 = arith.constant 0 : index
    %16 = vector.load %arg3[%c1_12, %c0_13, %c0_14] : memref<6x128x128xf32, #tpu.memory_space<vmem>>, vector<1x128x128xf32>
    %17 = vector.shape_cast %16 : vector<1x128x128xf32> to vector<128x128xf32>
    %cst_15 = arith.constant dense<0.000000e+00> : vector<8x128xf32>
    %18 = tpu.matmul %15, %17, %cst_15 {dimension_numbers = #tpu.dot_dimension_numbers<[1], [0], [0], [1], [0, 0, 1, 1], [], []>} : vector<8x128xf32>, vector<128x128xf32>, vector<8x128xf32> -> vector<8x128xf32>
    %c2 = arith.constant 2 : index
    %c0_16 = arith.constant 0 : index
    %c0_17 = arith.constant 0 : index
    %19 = vector.load %arg4[%c2, %c0_16, %c0_17] : memref<7x1x128xf32, #tpu.memory_space<vmem>>, vector<1x1x128xf32>
    %20 = vector.shape_cast %19 : vector<1x1x128xf32> to vector<1x128xf32>
    %21 = vector.broadcast %20 : vector<1x128xf32> to vector<8x128xf32>
    %22 = arith.addf %18, %21 : vector<8x128xf32>
    %23 = math.tanh %22 : vector<8x128xf32>
    %c2_18 = arith.constant 2 : index
    %c0_19 = arith.constant 0 : index
    %c0_20 = arith.constant 0 : index
    %24 = vector.load %arg3[%c2_18, %c0_19, %c0_20] : memref<6x128x128xf32, #tpu.memory_space<vmem>>, vector<1x128x128xf32>
    %25 = vector.shape_cast %24 : vector<1x128x128xf32> to vector<128x128xf32>
    %cst_21 = arith.constant dense<0.000000e+00> : vector<8x128xf32>
    %26 = tpu.matmul %23, %25, %cst_21 {dimension_numbers = #tpu.dot_dimension_numbers<[1], [0], [0], [1], [0, 0, 1, 1], [], []>} : vector<8x128xf32>, vector<128x128xf32>, vector<8x128xf32> -> vector<8x128xf32>
    %c3 = arith.constant 3 : index
    %c0_22 = arith.constant 0 : index
    %c0_23 = arith.constant 0 : index
    %27 = vector.load %arg4[%c3, %c0_22, %c0_23] : memref<7x1x128xf32, #tpu.memory_space<vmem>>, vector<1x1x128xf32>
    %28 = vector.shape_cast %27 : vector<1x1x128xf32> to vector<1x128xf32>
    %29 = vector.broadcast %28 : vector<1x128xf32> to vector<8x128xf32>
    %30 = arith.addf %26, %29 : vector<8x128xf32>
    %31 = math.tanh %30 : vector<8x128xf32>
    %c3_24 = arith.constant 3 : index
    %c0_25 = arith.constant 0 : index
    %c0_26 = arith.constant 0 : index
    %32 = vector.load %arg3[%c3_24, %c0_25, %c0_26] : memref<6x128x128xf32, #tpu.memory_space<vmem>>, vector<1x128x128xf32>
    %33 = vector.shape_cast %32 : vector<1x128x128xf32> to vector<128x128xf32>
    %cst_27 = arith.constant dense<0.000000e+00> : vector<8x128xf32>
    %34 = tpu.matmul %31, %33, %cst_27 {dimension_numbers = #tpu.dot_dimension_numbers<[1], [0], [0], [1], [0, 0, 1, 1], [], []>} : vector<8x128xf32>, vector<128x128xf32>, vector<8x128xf32> -> vector<8x128xf32>
    %c4 = arith.constant 4 : index
    %c0_28 = arith.constant 0 : index
    %c0_29 = arith.constant 0 : index
    %35 = vector.load %arg4[%c4, %c0_28, %c0_29] : memref<7x1x128xf32, #tpu.memory_space<vmem>>, vector<1x1x128xf32>
    %36 = vector.shape_cast %35 : vector<1x1x128xf32> to vector<1x128xf32>
    %37 = vector.broadcast %36 : vector<1x128xf32> to vector<8x128xf32>
    %38 = arith.addf %34, %37 : vector<8x128xf32>
    %39 = math.tanh %38 : vector<8x128xf32>
    %c4_30 = arith.constant 4 : index
    %c0_31 = arith.constant 0 : index
    %c0_32 = arith.constant 0 : index
    %40 = vector.load %arg3[%c4_30, %c0_31, %c0_32] : memref<6x128x128xf32, #tpu.memory_space<vmem>>, vector<1x128x128xf32>
    %41 = vector.shape_cast %40 : vector<1x128x128xf32> to vector<128x128xf32>
    %cst_33 = arith.constant dense<0.000000e+00> : vector<8x128xf32>
    %42 = tpu.matmul %39, %41, %cst_33 {dimension_numbers = #tpu.dot_dimension_numbers<[1], [0], [0], [1], [0, 0, 1, 1], [], []>} : vector<8x128xf32>, vector<128x128xf32>, vector<8x128xf32> -> vector<8x128xf32>
    %c5 = arith.constant 5 : index
    %c0_34 = arith.constant 0 : index
    %c0_35 = arith.constant 0 : index
    %43 = vector.load %arg4[%c5, %c0_34, %c0_35] : memref<7x1x128xf32, #tpu.memory_space<vmem>>, vector<1x1x128xf32>
    %44 = vector.shape_cast %43 : vector<1x1x128xf32> to vector<1x128xf32>
    %45 = vector.broadcast %44 : vector<1x128xf32> to vector<8x128xf32>
    %46 = arith.addf %42, %45 : vector<8x128xf32>
    %47 = math.tanh %46 : vector<8x128xf32>
    %c5_36 = arith.constant 5 : index
    %c0_37 = arith.constant 0 : index
    %c0_38 = arith.constant 0 : index
    %48 = vector.load %arg3[%c5_36, %c0_37, %c0_38] : memref<6x128x128xf32, #tpu.memory_space<vmem>>, vector<1x128x128xf32>
    %49 = vector.shape_cast %48 : vector<1x128x128xf32> to vector<128x128xf32>
    %cst_39 = arith.constant dense<0.000000e+00> : vector<8x128xf32>
    %50 = tpu.matmul %47, %49, %cst_39 {dimension_numbers = #tpu.dot_dimension_numbers<[1], [0], [0], [1], [0, 0, 1, 1], [], []>} : vector<8x128xf32>, vector<128x128xf32>, vector<8x128xf32> -> vector<8x128xf32>
    %c6 = arith.constant 6 : index
    %c0_40 = arith.constant 0 : index
    %c0_41 = arith.constant 0 : index
    %51 = vector.load %arg4[%c6, %c0_40, %c0_41] : memref<7x1x128xf32, #tpu.memory_space<vmem>>, vector<1x1x128xf32>
    %52 = vector.shape_cast %51 : vector<1x1x128xf32> to vector<1x128xf32>
    %53 = vector.broadcast %52 : vector<1x128xf32> to vector<8x128xf32>
    %54 = arith.addf %50, %53 : vector<8x128xf32>
    %c0_42 = arith.constant 0 : index
    %c0_43 = arith.constant 0 : index
    %55 = vector.load %arg5[%c0_42, %c0_43] : memref<8x128xf32, #tpu.memory_space<vmem>>, vector<8x128xf32>
    tpu.vector_store %arg5[%c0_42, %c0_43], %54 {strides = array<i32>} : memref<8x128xf32, #tpu.memory_space<vmem>>, vector<8x128xf32>,
    return
  }
  func.func @transform_0(%arg0: i32) -> (i32, i32) {
    %c0_i32 = arith.constant 0 : i32
    %c0_i32_0 = arith.constant 0 : i32
    return %arg0, %c0_i32 : i32, i32
  }
  func.func @transform_1(%arg0: i32) -> (i32, i32) {
    %c0_i32 = arith.constant 0 : i32
    %c0_i32_0 = arith.constant 0 : i32
    %c0_i32_1 = arith.constant 0 : i32
    return %c0_i32, %c0_i32_0 : i32, i32
  }
  func.func @transform_2(%arg0: i32) -> (i32, i32, i32) {
    %c0_i32 = arith.constant 0 : i32
    %c0_i32_0 = arith.constant 0 : i32
    %c0_i32_1 = arith.constant 0 : i32
    %c0_i32_2 = arith.constant 0 : i32
    return %c0_i32, %c0_i32_0, %c0_i32_1 : i32, i32, i32
  }
  func.func @transform_3(%arg0: i32) -> (i32, i32, i32) {
    %c0_i32 = arith.constant 0 : i32
    %c0_i32_0 = arith.constant 0 : i32
    %c0_i32_1 = arith.constant 0 : i32
    %c0_i32_2 = arith.constant 0 : i32
    return %c0_i32, %c0_i32_0, %c0_i32_1 : i32, i32, i32
  }
  func.func @transform_4(%arg0: i32) -> (i32, i32) {
    %c0_i32 = arith.constant 0 : i32
    %c0_i32_0 = arith.constant 0 : i32
    return %arg0, %c0_i32 : i32, i32
  }
}

</mosaic_0001>

<llo_original>
// kernel: embedded_custom_network_forward.1
$region0: #{embedded_custom_network_forward.1}
  #allocation0 [shape = 'u32[]', space=smem, size = 0x4, offset = 0x4, fixed_abs, tag = 'smem constant byte address 0x4 - core index']
  #allocation1 [shape = 'u32[144,128]{1,0:T(1,128)}', space=vmem, size = 0x12000, scoped, tag = 'internal scratch']
  %s0 = inlined_call_operand.vmem [shape: f32[8,32], index: 0, kind: input, shape index: {}]
  %s1 = inlined_call_operand.vmem [shape: f32[32,128], index: 1, kind: input, shape index: {}]
  %s2 = inlined_call_operand.hbm [shape: f32[6,128,128], index: 2, kind: input, shape index: {}]
  %s3 = inlined_call_operand.vmem [shape: f32[7,1,128], index: 3, kind: input, shape index: {}]
  %s4 = inlined_call_operand.hbm [shape: f32[8,128], index: 4, kind: output, shape index: {}]
  %s5 = sld [smem:[#allocation0]]
  $region30: #{embedded_custom_network_forward.1} parent=0
    _
  %s7 = ssub.s32 1, %s5
  %s8 = scalar_select 0, %s7, %s5
  $region1: #{embedded_custom_network_forward.1} parent=0
    #allocation2 [shape = 'u8[393216]{0}', space=vmem, size = 0x60000, scoped, tag = 'input window, operand 2, single buffered']
    #allocation3 [shape = 's32[1]{0}', space=sflag, size = 0x4, scoped, tag = 'scoped memory for embedded_custom_network_forward.1']
    #allocation4 [shape = 's32[1]{0}', space=sflag, size = 0x4, scoped, tag = 'scoped memory for embedded_custom_network_forward.1']
    #allocation5 [shape = 'u8[4096]{0}', space=vmem, size = 0x1000, scoped, tag = 'output window, operand 0, single buffered']
    %9 = vsyncpa [#allocation3], 0
    %10 = vsyncpa [#allocation4], 0
    // Predicated region
    $region2: #{embedded_custom_network_forward.1} parent=1 // pred_check
      _
    $region3: #{embedded_custom_network_forward.1} parent=1 // pred_check_branch
      %12 = sbr.rel (0) target = $region5
    $region4: #{embedded_custom_network_forward.1} parent=1 // pred_region
      _
    $region5: #{embedded_custom_network_forward.1} parent=1 // pred_fallthru
      _
    // Predicated region
    $region6: #{embedded_custom_network_forward.1} parent=1 // pred_check
      _
    $region7: #{embedded_custom_network_forward.1} parent=1 // pred_check_branch
      %14 = sbr.rel (0) target = $region9
    $region8: #{embedded_custom_network_forward.1} parent=1 // pred_region
      _
    $region9: #{embedded_custom_network_forward.1} parent=1 // pred_fallthru
      _
    // Predicated region
    $region10: #{embedded_custom_network_forward.1} parent=1 // pred_check
      _
    $region11: #{embedded_custom_network_forward.1} parent=1 // pred_check_branch
      %16 = sbr.rel (0) target = $region13
    $region12: #{embedded_custom_network_forward.1} parent=1 // pred_region
      %s18 = ssub.s32 12288, 12288
      %19 = vsyncadd [#allocation3], %s18
      %s20 = sshll.u32 [#allocation2], 4
      %s21 = int_to_ptr.vmem [resolvable:$true] %s20
      %26 = dma.hbm_to_vmem [thread:$0]  %s2, 12288, %s21, [#allocation3], 128, 128, 8
    $region13: #{embedded_custom_network_forward.1} parent=1 // pred_fallthru
      _
    // Predicated region
    $region14: #{embedded_custom_network_forward.1} parent=1 // pred_check
      _
    $region15: #{embedded_custom_network_forward.1} parent=1 // pred_check_branch
      %28 = sbr.rel (0) target = $region17
    $region16: #{embedded_custom_network_forward.1} parent=1 // pred_region
      _
    $region17: #{embedded_custom_network_forward.1} parent=1 // pred_fallthru
      _
    // Predicated region
    $region18: #{embedded_custom_network_forward.1} parent=1 // pred_check
      _
    $region19: #{embedded_custom_network_forward.1} parent=1 // pred_check_branch
      %30 = sbr.rel (0) target = $region21
    $region20: #{embedded_custom_network_forward.1} parent=1 // pred_region
      %31 = dma.done [#allocation3], 12288
    $region21: #{embedded_custom_network_forward.1} parent=1 // pred_fallthru
      _
    %v32 = vld [vmem:[%s0] sm:$0xff]
    %v33 = vld [vmem:[%s1] sm:$0xff]
    %v34 = vld [vmem:[%s1 + $0x8] sm:$0xff]
    %v35 = vld [vmem:[%s1 + $0x10] sm:$0xff]
    %v36 = vld [vmem:[%s1 + $0x18] sm:$0xff]
    %v37 = vld [vmem:[%s3] sm:$0x1]
    %v39 = vlaneseq
    %v40 = vshrl.u32 %v39, 7
    %v41 = vsub.s32 0, %v40
    %v42 = vrot.slane %v37, %v41
    %vm44 = vcmask 261120
    %v46 = vsel %vm44, %v32, 0
    %48 = vmatprep.subr.mxu0 0.0
    %49 = vmatpush1.msra.mxu0 0.0
    %50 = vmatprep.subr.mxu0 0.0
    %51 = vmatpush1.msra.mxu0 0.0
    %52 = vmatprep.subr.mxu0 0.0
    %53 = vmatpush1.msra.mxu0 0.0
    %54 = vmatprep.subr.mxu0 0.0
    %55 = vmatpush1.msra.mxu0 0.0
    %56 = vmatprep.subr.mxu0 0.0
    %57 = vmatpush1.msra.mxu0 0.0
    %58 = vmatprep.subr.mxu0 0.0
    %59 = vmatpush1.msra.mxu0 0.0
    %60 = vmatprep.subr.mxu0 0.0
    %61 = vmatpush1.msra.mxu0 0.0
    %62 = vmatprep.subr.mxu0 0.0
    %63 = vmatpush1.msra.mxu0 0.0
    %64 = vmatprep.subr.mxu0 0.0
    %65 = vmatpush1.msra.mxu0 0.0
    %66 = vmatprep.subr.mxu0 0.0
    %67 = vmatpush1.msra.mxu0 0.0
    %68 = vmatprep.subr.mxu0 0.0
    %69 = vmatpush1.msra.mxu0 0.0
    %70 = vmatprep.subr.mxu0 0.0
    %71 = vmatpush1.msra.mxu0 0.0
    %72 = vmatprep.subr.mxu0 0.0
    %73 = vmatpush1.msra.mxu0 %v36
    %74 = vmatprep.subr.mxu0 0.0
    %75 = vmatpush1.msra.mxu0 %v35
    %76 = vmatprep.subr.mxu0 0.0
    %77 = vmatpush1.msra.mxu0 %v34
    %78 = vmatprep.subr.mxu0 0.0
    %79 = vmatpush1.msra.mxu0 %v33
    %80 = vmatprep.subr.mxu0 0.0
    %81 = vmatpush2.msra.mxu0 0.0
    %82 = vmatprep.subr.mxu0 0.0
    %83 = vmatpush2.msra.mxu0 0.0
    %84 = vmatprep.subr.mxu0 0.0
    %85 = vmatpush2.msra.mxu0 0.0
    %86 = vmatprep.subr.mxu0 0.0
    %87 = vmatpush2.msra.mxu0 0.0
    %88 = vmatprep.subr.mxu0 0.0
    %89 = vmatpush2.msra.mxu0 0.0
    %90 = vmatprep.subr.mxu0 0.0
    %91 = vmatpush2.msra.mxu0 0.0
    %92 = vmatprep.subr.mxu0 0.0
    %93 = vmatpush2.msra.mxu0 0.0
    %94 = vmatprep.subr.mxu0 0.0
    %95 = vmatpush2.msra.mxu0 0.0
    %96 = vmatprep.subr.mxu0 0.0
    %97 = vmatpush2.msra.mxu0 0.0
    %98 = vmatprep.subr.mxu0 0.0
    %99 = vmatpush2.msra.mxu0 0.0
    %100 = vmatprep.subr.mxu0 0.0
    %101 = vmatpush2.msra.mxu0 0.0
    %102 = vmatprep.subr.mxu0 0.0
    %103 = vmatpush2.msra.mxu0 0.0
    %104 = vmatprep.subr.mxu0 0.0
    %105 = vmatpush2.msra.mxu0 0.0
    %106 = vmatprep.subr.mxu0 0.0
    %107 = vmatpush2.msra.mxu0 0.0
    %108 = vmatprep.subr.mxu0 0.0
    %109 = vmatpush2.msra.mxu0 0.0
    %110 = vmatprep.subr.mxu0 0.0
    %111 = vmatpush2.msra.mxu0 0.0
    %112 = vmatprep.mubr.f32.mxu0 0.0
    %113 = vmatmul.mubr.f32.gmra.mxu0 %v46
    %v114 = vpop.f32.mrf.mxu0
    %v115 = vadd.f32 %v42, %v114
    %v116 = vpop.f32.mrf.mxu0
    %117 = vdwg.mxu0
    %v118 = vtanh.pop %v115
    %v119 = vld [vmem:[#allocation2] sm:$0xff]
    %v120 = vld [vmem:[#allocation2 + $0x8] sm:$0xff]
    %v121 = vld [vmem:[#allocation2 + $0x10] sm:$0xff]
    %v122 = vld [vmem:[#allocation2 + $0x18] sm:$0xff]
    %v123 = vld [vmem:[#allocation2 + $0x20] sm:$0xff]
    %v124 = vld [vmem:[#allocation2 + $0x28] sm:$0xff]
    %v125 = vld [vmem:[#allocation2 + $0x30] sm:$0xff]
    %v126 = vld [vmem:[#allocation2 + $0x38] sm:$0xff]
    %v127 = vld [vmem:[#allocation2 + $0x40] sm:$0xff]
    %v128 = vld [vmem:[#allocation2 + $0x48] sm:$0xff]
    %v129 = vld [vmem:[#allocation2 + $0x50] sm:$0xff]
    %v130 = vld [vmem:[#allocation2 + $0x58] sm:$0xff]
    %v131 = vld [vmem:[#allocation2 + $0x60] sm:$0xff]
    %v132 = vld [vmem:[#allocation2 + $0x68] sm:$0xff]
    %v133 = vld [vmem:[#allocation2 + $0x70] sm:$0xff]
    %v134 = vld [vmem:[#allocation2 + $0x78] sm:$0xff]
    %s135 = scalar_lea.vmem %s3, 1
    %v136 = vld [vmem:[%s135] sm:$0x1]
    %v138 = vlaneseq
    %v139 = vshrl.u32 %v138, 7
    %v140 = vsub.s32 0, %v139
    %v141 = vrot.slane %v136, %v140
    %143 = vmatprep.subr.mxu0 0.0
    %144 = vmatpush1.msra.mxu0 %v134
    %145 = vmatprep.subr.mxu0 0.0
    %146 = vmatpush1.msra.mxu0 %v133
    %147 = vmatprep.subr.mxu0 0.0
    %148 = vmatpush1.msra.mxu0 %v132
    %149 = vmatprep.subr.mxu0 0.0
    %150 = vmatpush1.msra.mxu0 %v131
    %151 = vmatprep.subr.mxu0 0.0
    %152 = vmatpush1.msra.mxu0 %v130
    %153 = vmatprep.subr.mxu0 0.0
    %154 = vmatpush1.msra.mxu0 %v129
    %155 = vmatprep.subr.mxu0 0.0
    %156 = vmatpush1.msra.mxu0 %v128
    %157 = vmatprep.subr.mxu0 0.0
    %158 = vmatpush1.msra.mxu0 %v127
    %159 = vmatprep.subr.mxu0 0.0
    %160 = vmatpush1.msra.mxu0 %v126
    %161 = vmatprep.subr.mxu0 0.0
    %162 = vmatpush1.msra.mxu0 %v125
    %163 = vmatprep.subr.mxu0 0.0
    %164 = vmatpush1.msra.mxu0 %v124
    %165 = vmatprep.subr.mxu0 0.0
    %166 = vmatpush1.msra.mxu0 %v123
    %167 = vmatprep.subr.mxu0 0.0
    %168 = vmatpush1.msra.mxu0 %v122
    %169 = vmatprep.subr.mxu0 0.0
    %170 = vmatpush1.msra.mxu0 %v121
    %171 = vmatprep.subr.mxu0 0.0
    %172 = vmatpush1.msra.mxu0 %v120
    %173 = vmatprep.subr.mxu0 0.0
    %174 = vmatpush1.msra.mxu0 %v119
    %175 = vmatprep.subr.mxu0 0.0
    %176 = vmatpush2.msra.mxu0 0.0
    %177 = vmatprep.subr.mxu0 0.0
    %178 = vmatpush2.msra.mxu0 0.0
    %179 = vmatprep.subr.mxu0 0.0
    %180 = vmatpush2.msra.mxu0 0.0
    %181 = vmatprep.subr.mxu0 0.0
    %182 = vmatpush2.msra.mxu0 0.0
    %183 = vmatprep.subr.mxu0 0.0
    %184 = vmatpush2.msra.mxu0 0.0
    %185 = vmatprep.subr.mxu0 0.0
    %186 = vmatpush2.msra.mxu0 0.0
    %187 = vmatprep.subr.mxu0 0.0
    %188 = vmatpush2.msra.mxu0 0.0
    %189 = vmatprep.subr.mxu0 0.0
    %190 = vmatpush2.msra.mxu0 0.0
    %191 = vmatprep.subr.mxu0 0.0
    %192 = vmatpush2.msra.mxu0 0.0
    %193 = vmatprep.subr.mxu0 0.0
    %194 = vmatpush2.msra.mxu0 0.0
    %195 = vmatprep.subr.mxu0 0.0
    %196 = vmatpush2.msra.mxu0 0.0
    %197 = vmatprep.subr.mxu0 0.0
    %198 = vmatpush2.msra.mxu0 0.0
    %199 = vmatprep.subr.mxu0 0.0
    %200 = vmatpush2.msra.mxu0 0.0
    %201 = vmatprep.subr.mxu0 0.0
    %202 = vmatpush2.msra.mxu0 0.0
    %203 = vmatprep.subr.mxu0 0.0
    %204 = vmatpush2.msra.mxu0 0.0
    %205 = vmatprep.subr.mxu0 0.0
    %206 = vmatpush2.msra.mxu0 0.0
    %207 = vmatprep.mubr.f32.mxu0 0.0
    %208 = vmatmul.mubr.f32.gmra.mxu0 %v118
    %v209 = vpop.f32.mrf.mxu0
    %v210 = vadd.f32 %v141, %v209
    %v211 = vpop.f32.mrf.mxu0
    %212 = vdwg.mxu0
    %v213 = vtanh.pop %v210
    %s214 = scalar_lea.vmem [#allocation2], 128
    %v215 = vld [vmem:[%s214] sm:$0xff]
    %v216 = vld [vmem:[%s214 + $0x8] sm:$0xff]
    %v217 = vld [vmem:[%s214 + $0x10] sm:$0xff]
    %v218 = vld [vmem:[%s214 + $0x18] sm:$0xff]
    %v219 = vld [vmem:[%s214 + $0x20] sm:$0xff]
    %v220 = vld [vmem:[%s214 + $0x28] sm:$0xff]
    %v221 = vld [vmem:[%s214 + $0x30] sm:$0xff]
    %v222 = vld [vmem:[%s214 + $0x38] sm:$0xff]
    %v223 = vld [vmem:[%s214 + $0x40] sm:$0xff]
    %v224 = vld [vmem:[%s214 + $0x48] sm:$0xff]
    %v225 = vld [vmem:[%s214 + $0x50] sm:$0xff]
    %v226 = vld [vmem:[%s214 + $0x58] sm:$0xff]
    %v227 = vld [vmem:[%s214 + $0x60] sm:$0xff]
    %v228 = vld [vmem:[%s214 + $0x68] sm:$0xff]
    %v229 = vld [vmem:[%s214 + $0x70] sm:$0xff]
    %v230 = vld [vmem:[%s214 + $0x78] sm:$0xff]
    %s231 = scalar_lea.vmem %s3, 2
    %v232 = vld [vmem:[%s231] sm:$0x1]
    %v234 = vlaneseq
    %v235 = vshrl.u32 %v234, 7
    %v236 = vsub.s32 0, %v235
    %v237 = vrot.slane %v232, %v236
    %239 = vmatprep.subr.mxu0 0.0
    %240 = vmatpush1.msra.mxu0 %v230
    %241 = vmatprep.subr.mxu0 0.0
    %242 = vmatpush1.msra.mxu0 %v229
    %243 = vmatprep.subr.mxu0 0.0
    %244 = vmatpush1.msra.mxu0 %v228
    %245 = vmatprep.subr.mxu0 0.0
    %246 = vmatpush1.msra.mxu0 %v227
    %247 = vmatprep.subr.mxu0 0.0
    %248 = vmatpush1.msra.mxu0 %v226
    %249 = vmatprep.subr.mxu0 0.0
    %250 = vmatpush1.msra.mxu0 %v225
    %251 = vmatprep.subr.mxu0 0.0
    %252 = vmatpush1.msra.mxu0 %v224
    %253 = vmatprep.subr.mxu0 0.0
    %254 = vmatpush1.msra.mxu0 %v223
    %255 = vmatprep.subr.mxu0 0.0
    %256 = vmatpush1.msra.mxu0 %v222
    %257 = vmatprep.subr.mxu0 0.0
    %258 = vmatpush1.msra.mxu0 %v221
    %259 = vmatprep.subr.mxu0 0.0
    %260 = vmatpush1.msra.mxu0 %v220
    %261 = vmatprep.subr.mxu0 0.0
    %262 = vmatpush1.msra.mxu0 %v219
    %263 = vmatprep.subr.mxu0 0.0
    %264 = vmatpush1.msra.mxu0 %v218
    %265 = vmatprep.subr.mxu0 0.0
    %266 = vmatpush1.msra.mxu0 %v217
    %267 = vmatprep.subr.mxu0 0.0
    %268 = vmatpush1.msra.mxu0 %v216
    %269 = vmatprep.subr.mxu0 0.0
    %270 = vmatpush1.msra.mxu0 %v215
    %271 = vmatprep.subr.mxu0 0.0
    %272 = vmatpush2.msra.mxu0 0.0
    %273 = vmatprep.subr.mxu0 0.0
    %274 = vmatpush2.msra.mxu0 0.0
    %275 = vmatprep.subr.mxu0 0.0
    %276 = vmatpush2.msra.mxu0 0.0
    %277 = vmatprep.subr.mxu0 0.0
    %278 = vmatpush2.msra.mxu0 0.0
    %279 = vmatprep.subr.mxu0 0.0
    %280 = vmatpush2.msra.mxu0 0.0
    %281 = vmatprep.subr.mxu0 0.0
    %282 = vmatpush2.msra.mxu0 0.0
    %283 = vmatprep.subr.mxu0 0.0
    %284 = vmatpush2.msra.mxu0 0.0
    %285 = vmatprep.subr.mxu0 0.0
    %286 = vmatpush2.msra.mxu0 0.0
    %287 = vmatprep.subr.mxu0 0.0
    %288 = vmatpush2.msra.mxu0 0.0
    %289 = vmatprep.subr.mxu0 0.0
    %290 = vmatpush2.msra.mxu0 0.0
    %291 = vmatprep.subr.mxu0 0.0
    %292 = vmatpush2.msra.mxu0 0.0
    %293 = vmatprep.subr.mxu0 0.0
    %294 = vmatpush2.msra.mxu0 0.0
    %295 = vmatprep.subr.mxu0 0.0
    %296 = vmatpush2.msra.mxu0 0.0
    %297 = vmatprep.subr.mxu0 0.0
    %298 = vmatpush2.msra.mxu0 0.0
    %299 = vmatprep.subr.mxu0 0.0
    %300 = vmatpush2.msra.mxu0 0.0
    %301 = vmatprep.subr.mxu0 0.0
    %302 = vmatpush2.msra.mxu0 0.0
    %303 = vmatprep.mubr.f32.mxu0 0.0
    %304 = vmatmul.mubr.f32.gmra.mxu0 %v213
    %v305 = vpop.f32.mrf.mxu0
    %v306 = vadd.f32 %v237, %v305
    %v307 = vpop.f32.mrf.mxu0
    %308 = vdwg.mxu0
    %v309 = vtanh.pop %v306
    %s310 = scalar_lea.vmem [#allocation2], 256
    %v311 = vld [vmem:[%s310] sm:$0xff]
    %v312 = vld [vmem:[%s310 + $0x8] sm:$0xff]
    %v313 = vld [vmem:[%s310 + $0x10] sm:$0xff]
    %v314 = vld [vmem:[%s310 + $0x18] sm:$0xff]
    %v315 = vld [vmem:[%s310 + $0x20] sm:$0xff]
    %v316 = vld [vmem:[%s310 + $0x28] sm:$0xff]
    %v317 = vld [vmem:[%s310 + $0x30] sm:$0xff]
    %v318 = vld [vmem:[%s310 + $0x38] sm:$0xff]
    %v319 = vld [vmem:[%s310 + $0x40] sm:$0xff]
    %v320 = vld [vmem:[%s310 + $0x48] sm:$0xff]
    %v321 = vld [vmem:[%s310 + $0x50] sm:$0xff]
    %v322 = vld [vmem:[%s310 + $0x58] sm:$0xff]
    %v323 = vld [vmem:[%s310 + $0x60] sm:$0xff]
    %v324 = vld [vmem:[%s310 + $0x68] sm:$0xff]
    %v325 = vld [vmem:[%s310 + $0x70] sm:$0xff]
    %v326 = vld [vmem:[%s310 + $0x78] sm:$0xff]
    %s327 = scalar_lea.vmem %s3, 3
    %v328 = vld [vmem:[%s327] sm:$0x1]
    %v330 = vlaneseq
    %v331 = vshrl.u32 %v330, 7
    %v332 = vsub.s32 0, %v331
    %v333 = vrot.slane %v328, %v332
    %335 = vmatprep.subr.mxu0 0.0
    %336 = vmatpush1.msra.mxu0 %v326
    %337 = vmatprep.subr.mxu0 0.0
    %338 = vmatpush1.msra.mxu0 %v325
    %339 = vmatprep.subr.mxu0 0.0
    %340 = vmatpush1.msra.mxu0 %v324
    %341 = vmatprep.subr.mxu0 0.0
    %342 = vmatpush1.msra.mxu0 %v323
    %343 = vmatprep.subr.mxu0 0.0
    %344 = vmatpush1.msra.mxu0 %v322
    %345 = vmatprep.subr.mxu0 0.0
    %346 = vmatpush1.msra.mxu0 %v321
    %347 = vmatprep.subr.mxu0 0.0
    %348 = vmatpush1.msra.mxu0 %v320
    %349 = vmatprep.subr.mxu0 0.0
    %350 = vmatpush1.msra.mxu0 %v319
    %351 = vmatprep.subr.mxu0 0.0
    %352 = vmatpush1.msra.mxu0 %v318
    %353 = vmatprep.subr.mxu0 0.0
    %354 = vmatpush1.msra.mxu0 %v317
    %355 = vmatprep.subr.mxu0 0.0
    %356 = vmatpush1.msra.mxu0 %v316
    %357 = vmatprep.subr.mxu0 0.0
    %358 = vmatpush1.msra.mxu0 %v315
    %359 = vmatprep.subr.mxu0 0.0
    %360 = vmatpush1.msra.mxu0 %v314
    %361 = vmatprep.subr.mxu0 0.0
    %362 = vmatpush1.msra.mxu0 %v313
    %363 = vmatprep.subr.mxu0 0.0
    %364 = vmatpush1.msra.mxu0 %v312
    %365 = vmatprep.subr.mxu0 0.0
    %366 = vmatpush1.msra.mxu0 %v311
    %367 = vmatprep.subr.mxu0 0.0
    %368 = vmatpush2.msra.mxu0 0.0
    %369 = vmatprep.subr.mxu0 0.0
    %370 = vmatpush2.msra.mxu0 0.0
    %371 = vmatprep.subr.mxu0 0.0
    %372 = vmatpush2.msra.mxu0 0.0
    %373 = vmatprep.subr.mxu0 0.0
    %374 = vmatpush2.msra.mxu0 0.0
    %375 = vmatprep.subr.mxu0 0.0
    %376 = vmatpush2.msra.mxu0 0.0
    %377 = vmatprep.subr.mxu0 0.0
    %378 = vmatpush2.msra.mxu0 0.0
    %379 = vmatprep.subr.mxu0 0.0
    %380 = vmatpush2.msra.mxu0 0.0
    %381 = vmatprep.subr.mxu0 0.0
    %382 = vmatpush2.msra.mxu0 0.0
    %383 = vmatprep.subr.mxu0 0.0
    %384 = vmatpush2.msra.mxu0 0.0
    %385 = vmatprep.subr.mxu0 0.0
    %386 = vmatpush2.msra.mxu0 0.0
    %387 = vmatprep.subr.mxu0 0.0
    %388 = vmatpush2.msra.mxu0 0.0
    %389 = vmatprep.subr.mxu0 0.0
    %390 = vmatpush2.msra.mxu0 0.0
    %391 = vmatprep.subr.mxu0 0.0
    %392 = vmatpush2.msra.mxu0 0.0
    %393 = vmatprep.subr.mxu0 0.0
    %394 = vmatpush2.msra.mxu0 0.0
    %395 = vmatprep.subr.mxu0 0.0
    %396 = vmatpush2.msra.mxu0 0.0
    %397 = vmatprep.subr.mxu0 0.0
    %398 = vmatpush2.msra.mxu0 0.0
    %399 = vmatprep.mubr.f32.mxu0 0.0
    %400 = vmatmul.mubr.f32.gmra.mxu0 %v309
    %v401 = vpop.f32.mrf.mxu0
    %v402 = vadd.f32 %v333, %v401
    %v403 = vpop.f32.mrf.mxu0
    %404 = vdwg.mxu0
    %v405 = vtanh.pop %v402
    %s406 = scalar_lea.vmem [#allocation2], 384
    %v407 = vld [vmem:[%s406] sm:$0xff]
    %v408 = vld [vmem:[%s406 + $0x8] sm:$0xff]
    %v409 = vld [vmem:[%s406 + $0x10] sm:$0xff]
    %v410 = vld [vmem:[%s406 + $0x18] sm:$0xff]
    %v411 = vld [vmem:[%s406 + $0x20] sm:$0xff]
    %v412 = vld [vmem:[%s406 + $0x28] sm:$0xff]
    %v413 = vld [vmem:[%s406 + $0x30] sm:$0xff]
    %v414 = vld [vmem:[%s406 + $0x38] sm:$0xff]
    %v415 = vld [vmem:[%s406 + $0x40] sm:$0xff]
    %v416 = vld [vmem:[%s406 + $0x48] sm:$0xff]
    %v417 = vld [vmem:[%s406 + $0x50] sm:$0xff]
    %v418 = vld [vmem:[%s406 + $0x58] sm:$0xff]
    %v419 = vld [vmem:[%s406 + $0x60] sm:$0xff]
    %v420 = vld [vmem:[%s406 + $0x68] sm:$0xff]
    %v421 = vld [vmem:[%s406 + $0x70] sm:$0xff]
    %v422 = vld [vmem:[%s406 + $0x78] sm:$0xff]
    %s423 = scalar_lea.vmem %s3, 4
    %v424 = vld [vmem:[%s423] sm:$0x1]
    %v426 = vlaneseq
    %v427 = vshrl.u32 %v426, 7
    %v428 = vsub.s32 0, %v427
    %v429 = vrot.slane %v424, %v428
    %431 = vmatprep.subr.mxu0 0.0
    %432 = vmatpush1.msra.mxu0 %v422
    %433 = vmatprep.subr.mxu0 0.0
    %434 = vmatpush1.msra.mxu0 %v421
    %435 = vmatprep.subr.mxu0 0.0
    %436 = vmatpush1.msra.mxu0 %v420
    %437 = vmatprep.subr.mxu0 0.0
    %438 = vmatpush1.msra.mxu0 %v419
    %439 = vmatprep.subr.mxu0 0.0
    %440 = vmatpush1.msra.mxu0 %v418
    %441 = vmatprep.subr.mxu0 0.0
    %442 = vmatpush1.msra.mxu0 %v417
    %443 = vmatprep.subr.mxu0 0.0
    %444 = vmatpush1.msra.mxu0 %v416
    %445 = vmatprep.subr.mxu0 0.0
    %446 = vmatpush1.msra.mxu0 %v415
    %447 = vmatprep.subr.mxu0 0.0
    %448 = vmatpush1.msra.mxu0 %v414
    %449 = vmatprep.subr.mxu0 0.0
    %450 = vmatpush1.msra.mxu0 %v413
    %451 = vmatprep.subr.mxu0 0.0
    %452 = vmatpush1.msra.mxu0 %v412
    %453 = vmatprep.subr.mxu0 0.0
    %454 = vmatpush1.msra.mxu0 %v411
    %455 = vmatprep.subr.mxu0 0.0
    %456 = vmatpush1.msra.mxu0 %v410
    %457 = vmatprep.subr.mxu0 0.0
    %458 = vmatpush1.msra.mxu0 %v409
    %459 = vmatprep.subr.mxu0 0.0
    %460 = vmatpush1.msra.mxu0 %v408
    %461 = vmatprep.subr.mxu0 0.0
    %462 = vmatpush1.msra.mxu0 %v407
    %463 = vmatprep.subr.mxu0 0.0
    %464 = vmatpush2.msra.mxu0 0.0
    %465 = vmatprep.subr.mxu0 0.0
    %466 = vmatpush2.msra.mxu0 0.0
    %467 = vmatprep.subr.mxu0 0.0
    %468 = vmatpush2.msra.mxu0 0.0
    %469 = vmatprep.subr.mxu0 0.0
    %470 = vmatpush2.msra.mxu0 0.0
    %471 = vmatprep.subr.mxu0 0.0
    %472 = vmatpush2.msra.mxu0 0.0
    %473 = vmatprep.subr.mxu0 0.0
    %474 = vmatpush2.msra.mxu0 0.0
    %475 = vmatprep.subr.mxu0 0.0
    %476 = vmatpush2.msra.mxu0 0.0
    %477 = vmatprep.subr.mxu0 0.0
    %478 = vmatpush2.msra.mxu0 0.0
    %479 = vmatprep.subr.mxu0 0.0
    %480 = vmatpush2.msra.mxu0 0.0
    %481 = vmatprep.subr.mxu0 0.0
    %482 = vmatpush2.msra.mxu0 0.0
    %483 = vmatprep.subr.mxu0 0.0
    %484 = vmatpush2.msra.mxu0 0.0
    %485 = vmatprep.subr.mxu0 0.0
    %486 = vmatpush2.msra.mxu0 0.0
    %487 = vmatprep.subr.mxu0 0.0
    %488 = vmatpush2.msra.mxu0 0.0
    %489 = vmatprep.subr.mxu0 0.0
    %490 = vmatpush2.msra.mxu0 0.0
    %491 = vmatprep.subr.mxu0 0.0
    %492 = vmatpush2.msra.mxu0 0.0
    %493 = vmatprep.subr.mxu0 0.0
    %494 = vmatpush2.msra.mxu0 0.0
    %495 = vmatprep.mubr.f32.mxu0 0.0
    %496 = vmatmul.mubr.f32.gmra.mxu0 %v405
    %v497 = vpop.f32.mrf.mxu0
    %v498 = vadd.f32 %v429, %v497
    %v499 = vpop.f32.mrf.mxu0
    %500 = vdwg.mxu0
    %v501 = vtanh.pop %v498
    %s502 = scalar_lea.vmem [#allocation2], 512
    %v503 = vld [vmem:[%s502] sm:$0xff]
    %v504 = vld [vmem:[%s502 + $0x8] sm:$0xff]
    %v505 = vld [vmem:[%s502 + $0x10] sm:$0xff]
    %v506 = vld [vmem:[%s502 + $0x18] sm:$0xff]
    %v507 = vld [vmem:[%s502 + $0x20] sm:$0xff]
    %v508 = vld [vmem:[%s502 + $0x28] sm:$0xff]
    %v509 = vld [vmem:[%s502 + $0x30] sm:$0xff]
    %v510 = vld [vmem:[%s502 + $0x38] sm:$0xff]
    %v511 = vld [vmem:[%s502 + $0x40] sm:$0xff]
    %v512 = vld [vmem:[%s502 + $0x48] sm:$0xff]
    %v513 = vld [vmem:[%s502 + $0x50] sm:$0xff]
    %v514 = vld [vmem:[%s502 + $0x58] sm:$0xff]
    %v515 = vld [vmem:[%s502 + $0x60] sm:$0xff]
    %v516 = vld [vmem:[%s502 + $0x68] sm:$0xff]
    %v517 = vld [vmem:[%s502 + $0x70] sm:$0xff]
    %v518 = vld [vmem:[%s502 + $0x78] sm:$0xff]
    %s519 = scalar_lea.vmem %s3, 5
    %v520 = vld [vmem:[%s519] sm:$0x1]
    %v522 = vlaneseq
    %v523 = vshrl.u32 %v522, 7
    %v524 = vsub.s32 0, %v523
    %v525 = vrot.slane %v520, %v524
    %527 = vmatprep.subr.mxu0 0.0
    %528 = vmatpush1.msra.mxu0 %v518
    %529 = vmatprep.subr.mxu0 0.0
    %530 = vmatpush1.msra.mxu0 %v517
    %531 = vmatprep.subr.mxu0 0.0
    %532 = vmatpush1.msra.mxu0 %v516
    %533 = vmatprep.subr.mxu0 0.0
    %534 = vmatpush1.msra.mxu0 %v515
    %535 = vmatprep.subr.mxu0 0.0
    %536 = vmatpush1.msra.mxu0 %v514
    %537 = vmatprep.subr.mxu0 0.0
    %538 = vmatpush1.msra.mxu0 %v513
    %539 = vmatprep.subr.mxu0 0.0
    %540 = vmatpush1.msra.mxu0 %v512
    %541 = vmatprep.subr.mxu0 0.0
    %542 = vmatpush1.msra.mxu0 %v511
    %543 = vmatprep.subr.mxu0 0.0
    %544 = vmatpush1.msra.mxu0 %v510
    %545 = vmatprep.subr.mxu0 0.0
    %546 = vmatpush1.msra.mxu0 %v509
    %547 = vmatprep.subr.mxu0 0.0
    %548 = vmatpush1.msra.mxu0 %v508
    %549 = vmatprep.subr.mxu0 0.0
    %550 = vmatpush1.msra.mxu0 %v507
    %551 = vmatprep.subr.mxu0 0.0
    %552 = vmatpush1.msra.mxu0 %v506
    %553 = vmatprep.subr.mxu0 0.0
    %554 = vmatpush1.msra.mxu0 %v505
    %555 = vmatprep.subr.mxu0 0.0
    %556 = vmatpush1.msra.mxu0 %v504
    %557 = vmatprep.subr.mxu0 0.0
    %558 = vmatpush1.msra.mxu0 %v503
    %559 = vmatprep.subr.mxu0 0.0
    %560 = vmatpush2.msra.mxu0 0.0
    %561 = vmatprep.subr.mxu0 0.0
    %562 = vmatpush2.msra.mxu0 0.0
    %563 = vmatprep.subr.mxu0 0.0
    %564 = vmatpush2.msra.mxu0 0.0
    %565 = vmatprep.subr.mxu0 0.0
    %566 = vmatpush2.msra.mxu0 0.0
    %567 = vmatprep.subr.mxu0 0.0
    %568 = vmatpush2.msra.mxu0 0.0
    %569 = vmatprep.subr.mxu0 0.0
    %570 = vmatpush2.msra.mxu0 0.0
    %571 = vmatprep.subr.mxu0 0.0
    %572 = vmatpush2.msra.mxu0 0.0
    %573 = vmatprep.subr.mxu0 0.0
    %574 = vmatpush2.msra.mxu0 0.0
    %575 = vmatprep.subr.mxu0 0.0
    %576 = vmatpush2.msra.mxu0 0.0
    %577 = vmatprep.subr.mxu0 0.0
    %578 = vmatpush2.msra.mxu0 0.0
    %579 = vmatprep.subr.mxu0 0.0
    %580 = vmatpush2.msra.mxu0 0.0
    %581 = vmatprep.subr.mxu0 0.0
    %582 = vmatpush2.msra.mxu0 0.0
    %583 = vmatprep.subr.mxu0 0.0
    %584 = vmatpush2.msra.mxu0 0.0
    %585 = vmatprep.subr.mxu0 0.0
    %586 = vmatpush2.msra.mxu0 0.0
    %587 = vmatprep.subr.mxu0 0.0
    %588 = vmatpush2.msra.mxu0 0.0
    %589 = vmatprep.subr.mxu0 0.0
    %590 = vmatpush2.msra.mxu0 0.0
    %591 = vmatprep.mubr.f32.mxu0 0.0
    %592 = vmatmul.mubr.f32.gmra.mxu0 %v501
    %v593 = vpop.f32.mrf.mxu0
    %v594 = vadd.f32 %v525, %v593
    %v595 = vpop.f32.mrf.mxu0
    %596 = vdwg.mxu0
    %v597 = vtanh.pop %v594
    %s598 = scalar_lea.vmem [#allocation2], 640
    %v599 = vld [vmem:[%s598] sm:$0xff]
    %v600 = vld [vmem:[%s598 + $0x8] sm:$0xff]
    %v601 = vld [vmem:[%s598 + $0x10] sm:$0xff]
    %v602 = vld [vmem:[%s598 + $0x18] sm:$0xff]
    %v603 = vld [vmem:[%s598 + $0x20] sm:$0xff]
    %v604 = vld [vmem:[%s598 + $0x28] sm:$0xff]
    %v605 = vld [vmem:[%s598 + $0x30] sm:$0xff]
    %v606 = vld [vmem:[%s598 + $0x38] sm:$0xff]
    %v607 = vld [vmem:[%s598 + $0x40] sm:$0xff]
    %v608 = vld [vmem:[%s598 + $0x48] sm:$0xff]
    %v609 = vld [vmem:[%s598 + $0x50] sm:$0xff]
    %v610 = vld [vmem:[%s598 + $0x58] sm:$0xff]
    %v611 = vld [vmem:[%s598 + $0x60] sm:$0xff]
    %v612 = vld [vmem:[%s598 + $0x68] sm:$0xff]
    %v613 = vld [vmem:[%s598 + $0x70] sm:$0xff]
    %v614 = vld [vmem:[%s598 + $0x78] sm:$0xff]
    %s615 = scalar_lea.vmem %s3, 6
    %v616 = vld [vmem:[%s615] sm:$0x1]
    %v618 = vlaneseq
    %v619 = vshrl.u32 %v618, 7
    %v620 = vsub.s32 0, %v619
    %v621 = vrot.slane %v616, %v620
    %623 = vmatprep.subr.mxu0 0.0
    %624 = vmatpush1.msra.mxu0 %v614
    %625 = vmatprep.subr.mxu0 0.0
    %626 = vmatpush1.msra.mxu0 %v613
    %627 = vmatprep.subr.mxu0 0.0
    %628 = vmatpush1.msra.mxu0 %v612
    %629 = vmatprep.subr.mxu0 0.0
    %630 = vmatpush1.msra.mxu0 %v611
    %631 = vmatprep.subr.mxu0 0.0
    %632 = vmatpush1.msra.mxu0 %v610
    %633 = vmatprep.subr.mxu0 0.0
    %634 = vmatpush1.msra.mxu0 %v609
    %635 = vmatprep.subr.mxu0 0.0
    %636 = vmatpush1.msra.mxu0 %v608
    %637 = vmatprep.subr.mxu0 0.0
    %638 = vmatpush1.msra.mxu0 %v607
    %639 = vmatprep.subr.mxu0 0.0
    %640 = vmatpush1.msra.mxu0 %v606
    %641 = vmatprep.subr.mxu0 0.0
    %642 = vmatpush1.msra.mxu0 %v605
    %643 = vmatprep.subr.mxu0 0.0
    %644 = vmatpush1.msra.mxu0 %v604
    %645 = vmatprep.subr.mxu0 0.0
    %646 = vmatpush1.msra.mxu0 %v603
    %647 = vmatprep.subr.mxu0 0.0
    %648 = vmatpush1.msra.mxu0 %v602
    %649 = vmatprep.subr.mxu0 0.0
    %650 = vmatpush1.msra.mxu0 %v601
    %651 = vmatprep.subr.mxu0 0.0
    %652 = vmatpush1.msra.mxu0 %v600
    %653 = vmatprep.subr.mxu0 0.0
    %654 = vmatpush1.msra.mxu0 %v599
    %655 = vmatprep.subr.mxu0 0.0
    %656 = vmatpush2.msra.mxu0 0.0
    %657 = vmatprep.subr.mxu0 0.0
    %658 = vmatpush2.msra.mxu0 0.0
    %659 = vmatprep.subr.mxu0 0.0
    %660 = vmatpush2.msra.mxu0 0.0
    %661 = vmatprep.subr.mxu0 0.0
    %662 = vmatpush2.msra.mxu0 0.0
    %663 = vmatprep.subr.mxu0 0.0
    %664 = vmatpush2.msra.mxu0 0.0
    %665 = vmatprep.subr.mxu0 0.0
    %666 = vmatpush2.msra.mxu0 0.0
    %667 = vmatprep.subr.mxu0 0.0
    %668 = vmatpush2.msra.mxu0 0.0
    %669 = vmatprep.subr.mxu0 0.0
    %670 = vmatpush2.msra.mxu0 0.0
    %671 = vmatprep.subr.mxu0 0.0
    %672 = vmatpush2.msra.mxu0 0.0
    %673 = vmatprep.subr.mxu0 0.0
    %674 = vmatpush2.msra.mxu0 0.0
    %675 = vmatprep.subr.mxu0 0.0
    %676 = vmatpush2.msra.mxu0 0.0
    %677 = vmatprep.subr.mxu0 0.0
    %678 = vmatpush2.msra.mxu0 0.0
    %679 = vmatprep.subr.mxu0 0.0
    %680 = vmatpush2.msra.mxu0 0.0
    %681 = vmatprep.subr.mxu0 0.0
    %682 = vmatpush2.msra.mxu0 0.0
    %683 = vmatprep.subr.mxu0 0.0
    %684 = vmatpush2.msra.mxu0 0.0
    %685 = vmatprep.subr.mxu0 0.0
    %686 = vmatpush2.msra.mxu0 0.0
    %687 = vmatprep.mubr.f32.mxu0 0.0
    %688 = vmatmul.mubr.f32.gmra.mxu0 %v597
    %v689 = vpop.f32.mrf.mxu0
    %v690 = vadd.f32 %v621, %v689
    %v691 = vpop.f32.mrf.mxu0
    %692 = vdwg.mxu0
    %693 = vst [vmem:[#allocation5] sm:$0xff] %v690
    // Predicated region
    $region22: #{embedded_custom_network_forward.1} parent=1 // pred_check
      _
    $region23: #{embedded_custom_network_forward.1} parent=1 // pred_check_branch
      %695 = sbr.rel (0) target = $region25
    $region24: #{embedded_custom_network_forward.1} parent=1 // pred_region
      %s697 = ssub.s32 128, 128
      %698 = vsyncadd [#allocation4], %s697
      %s700 = sshll.u32 [#allocation5], 4
      %s701 = int_to_ptr.vmem [resolvable:$true] %s700
      %703 = dma.vmem_to_hbm [thread:$0]  %s701, 128, %s4, [#allocation4]
    $region25: #{embedded_custom_network_forward.1} parent=1 // pred_fallthru
      _
    // Predicated region
    $region26: #{embedded_custom_network_forward.1} parent=1 // pred_check
      _
    $region27: #{embedded_custom_network_forward.1} parent=1 // pred_check_branch
      %705 = sbr.rel (0) target = $region29
    $region28: #{embedded_custom_network_forward.1} parent=1 // pred_region
      %706 = dma.done [#allocation4], 128
    $region29: #{embedded_custom_network_forward.1} parent=1 // pred_fallthru
      _
    %707 = vsyncpa [#allocation3], 1
    %708 = vsyncpa [#allocation4], 1

</llo_original>
